<compile_context>
chip_gen: v6e
topology: v6e:2x2x1
jax: 0.10.0
libtpu: 0.0.40
codegen_flags: <defaults>
</compile_context>

<pallas_src>
import functools

import jax
import jax.numpy as jnp
from jax.experimental import pallas as pl
from jax.experimental.pallas import tpu as pltpu


# -----------------------------------------------------------------------------
# One-time device probe of pltpu.roll's rotation convention, so the 3x3 tap
# offsets are always built with the correct sign.
# -----------------------------------------------------------------------------
@functools.lru_cache(maxsize=None)
def _roll_matches_jnp() -> bool:
    def k(x_ref, o_ref):
        o_ref[...] = pltpu.roll(x_ref[...], 1, axis=1)

    x = jnp.broadcast_to(jnp.arange(128, dtype=jnp.float32), (8, 128))
    out = pl.pallas_call(k, out_shape=jax.ShapeDtypeStruct((8, 128), jnp.float32))(x)
    # jnp.roll(row, 1)[0] == row[-1] == 127
    return bool(out[0, 0] == 127.0)


def _shift_for_offset(off: int, n: int) -> int:
    """Shift s so that rolled[p] == x[(p + off) % n]."""
    return (-off) % n if _roll_matches_jnp() else off % n


# -----------------------------------------------------------------------------
# Kernel 1: frequency-domain pointwise MLP (1x1 conv -> ReLU -> 1x1 conv),
# channel-first:  out = W2 . relu(W1 . X),  X is (2C, tile_N) lane-dense.
# -----------------------------------------------------------------------------
def _freq_mlp_kernel(x_ref, w1_ref, w2_ref, o_ref):
    h = jnp.dot(w1_ref[...], x_ref[...], preferred_element_type=jnp.float32)
    h = jnp.maximum(h, 0.0)
    o_ref[...] = jnp.dot(w2_ref[...], h,
                         preferred_element_type=jnp.float32).astype(o_ref.dtype)


def freq_mlp(y_f, wf1, wf2, *, tile_n=1024):
    """y_f: (B, 2C, N) f32 channel-first.  wf1/wf2: (2C, 2C) PyTorch (out, in)."""
    b, c2, n = y_f.shape
    tile = min(tile_n, pl.cdiv(n, 128) * 128)          # lane tile, multiple of 128
    n_pad = pl.cdiv(n, tile) * tile
    if n_pad != n:
        y_f = jnp.pad(y_f, ((0, 0), (0, 0), (0, n_pad - n)))
    out = pl.pallas_call(
        _freq_mlp_kernel,
        out_shape=jax.ShapeDtypeStruct((b, c2, n_pad), jnp.float32),
        grid_spec=pltpu.PrefetchScalarGridSpec(
            num_scalar_prefetch=0,
            grid=(b, n_pad // tile),
            in_specs=[
                pl.BlockSpec((None, c2, tile), lambda i, j: (i, 0, j)),
                pl.BlockSpec((c2, c2), lambda i, j: (0, 0)),   # resident weights
                pl.BlockSpec((c2, c2), lambda i, j: (0, 0)),
            ],
            out_specs=pl.BlockSpec((None, c2, tile), lambda i, j: (i, 0, j)),
        ),
        compiler_params=pltpu.CompilerParams(
            dimension_semantics=("parallel", "parallel")),
    )(y_f, wf1, wf2)
    return out[:, :, :n]


# -----------------------------------------------------------------------------
# Kernel 2: fused spatial residual block, channel-first flattened layout.
#   o = conv3x3_2(relu(conv3x3_1(x))) + x + y_fft
# Each conv = one im2col matmul (C, 9C) x (9C, Np); taps built with pltpu.roll
# on the flattened zero-padded image (borders discarded by the wrapper slice).
# -----------------------------------------------------------------------------
def _make_spatial_kernel(wp: int, n_pad: int):
    offs = [(ky - 1) * wp + (kx - 1) for ky in range(3) for kx in range(3)]
    shifts = [None if o == 0 else _shift_for_offset(o, n_pad) for o in offs]

    def kernel(xp_ref, y_ref, mask_ref, w1_ref, w2_ref, o_ref):
        # xp_ref/y_ref : (C, n_pad)  zero-padded, flattened images (batch squeezed)
        # mask_ref     : (C, n_pad)  1.0 at interior positions, 0.0 on the border
        # w*_ref       : (C, 9C)     im2col-ordered conv weights
        def im2col(v):
            taps = [v if s is None else pltpu.roll(v, s, axis=1) for s in shifts]
            return jnp.concatenate(taps, axis=0)                 # (9C, n_pad)

        x = xp_ref[...]                                          # (C, n_pad)
        h = jnp.dot(w1_ref[...], im2col(x),
                    preferred_element_type=jnp.float32)          # conv1
        h = jnp.maximum(h, 0.0) * mask_ref[...]                  # ReLU + re-zero pad
        out = jnp.dot(w2_ref[...], im2col(h),
                      preferred_element_type=jnp.float32)        # conv2
        o_ref[...] = (out + x + y_ref[...]).astype(o_ref.dtype)  # + x + fft branch

    return kernel


def spatial_res_block(x, y_sp, ws1, ws2):
    """x, y_sp: (B, C, H, W) f32; ws1/ws2: PyTorch Conv2d weights (C, C, 3, 3)."""
    b, c, hh, ww = x.shape
    hp, wp = hh + 2, ww + 2
    n = hp * wp
    n_pad = pl.cdiv(n, 128) * 128

    def to_padded_flat(z):                       # (B,C,H,W) -> (B,C,n_pad), no transpose
        zp = jnp.pad(z, ((0, 0), (0, 0), (1, 1), (1, 1))).reshape(b, c, n)
        return jnp.pad(zp, ((0, 0), (0, 0), (0, n_pad - n)))

    xp = to_padded_flat(x)
    yp = to_padded_flat(y_sp)
    mask = jnp.pad(jnp.ones((hh, ww), jnp.float32), ((1, 1), (1, 1))).reshape(1, n)
    mask = jnp.tile(jnp.pad(mask, ((0, 0), (0, n_pad - n))), (c, 1))   # (C, n_pad)
    # im2col weight layout: row o, col (ky*3+kx)*C + i  ==  ws[o, i, ky, kx]
    w1i = jnp.transpose(ws1, (0, 2, 3, 1)).reshape(c, 9 * c)
    w2i = jnp.transpose(ws2, (0, 2, 3, 1)).reshape(c, 9 * c)

    out = pl.pallas_call(
        _make_spatial_kernel(wp, n_pad),
        out_shape=jax.ShapeDtypeStruct((b, c, n_pad), jnp.float32),
        grid_spec=pltpu.PrefetchScalarGridSpec(
            num_scalar_prefetch=0,
            grid=(b,),
            in_specs=[
                pl.BlockSpec((None, c, n_pad), lambda i: (i, 0, 0)),
                pl.BlockSpec((None, c, n_pad), lambda i: (i, 0, 0)),
                pl.BlockSpec((c, n_pad), lambda i: (0, 0)),        # resident mask
                pl.BlockSpec((c, 9 * c), lambda i: (0, 0)),        # resident weights
                pl.BlockSpec((c, 9 * c), lambda i: (0, 0)),
            ],
            out_specs=pl.BlockSpec((None, c, n_pad), lambda i: (i, 0, 0)),
        ),
        compiler_params=pltpu.CompilerParams(
            dimension_semantics=("parallel",)),
    )(xp, yp, mask, w1i, w2i)

    # Drop the flat padding and the 1-pixel border.
    return out[:, :, :n].reshape(b, c, hp, wp)[:, :, 1:hh + 1, 1:ww + 1]


# -----------------------------------------------------------------------------
# Full ResFBLOCK forward
# -----------------------------------------------------------------------------
def resfblock_forward(x, wf1, wf2, ws1, ws2, *, norm="backward"):
    """x: (B, C, H, W) f32.  wf1/wf2: (2C, 2C) 1x1-conv weights (out, in).
    ws1/ws2: (C, C, 3, 3) 3x3-conv weights (out, in, kH, kW). No biases."""
    b, c, hh, ww = x.shape
    # ---- frequency branch ---------------------------------------------------
    # TODO(synk): rfft2 / irfft2 have no Pallas primitive; they stay in XLA.
    y = jnp.fft.rfft2(x, norm=norm)                          # (B, C, H, Wf) c64
    wf = y.shape[-1]
    y_f = jnp.concatenate([y.real, y.imag], axis=1)          # (B, 2C, H, Wf)
    y_f = y_f.reshape(b, 2 * c, hh * wf)                     # channel-first, flat lanes
    y_f = freq_mlp(y_f, wf1, wf2)                            # Pallas kernel 1
    y_f = y_f.reshape(b, 2 * c, hh, wf)
    y_re, y_im = jnp.split(y_f, 2, axis=1)
    y_sp = jnp.fft.irfft2(jax.lax.complex(y_re, y_im), s=(hh, ww), norm=norm)
    # ---- spatial branch + both residual adds (fused Pallas kernel 2) --------
    return spatial_res_block(x, y_sp, ws1, ws2)


# -----------------------------------------------------------------------------
# Pure-JAX reference mirroring the PyTorch forward (ground truth, HIGHEST prec)
# -----------------------------------------------------------------------------
def _reference(x, wf1, wf2, ws1, ws2, norm="backward"):
    _, _, hh, ww = x.shape
    hi = jax.lax.Precision.HIGHEST
    y = jnp.fft.rfft2(x, norm=norm)
    y_f = jnp.concatenate([y.real, y.imag], axis=1)
    t = jnp.einsum("oi,bihw->bohw", wf1, y_f, precision=hi)
    t = jnp.maximum(t, 0.0)
    t = jnp.einsum("oi,bihw->bohw", wf2, t, precision=hi)
    y_re, y_im = jnp.split(t, 2, axis=1)
    y_sp = jnp.fft.irfft2(jax.lax.complex(y_re, y_im), s=(hh, ww), norm=norm)

    def conv3(z, w):
        return jax.lax.conv_general_dilated(
            z, w, window_strides=(1, 1), padding=((1, 1), (1, 1)),
            dimension_numbers=("NCHW", "OIHW", "NCHW"), precision=hi)

    m = conv3(x, ws1)
    m = jnp.maximum(m, 0.0)
    m = conv3(m, ws2)
    return m + x + y_sp


if __name__ == "__main__":
    key = jax.random.PRNGKey(0)
    B, C, H, W = 2, 8, 16, 16          # n_feat = 8
    kx, k1, k2, k3, k4 = jax.random.split(key, 5)
    x = jax.random.normal(kx, (B, C, H, W), dtype=jnp.float32)
    # main_fft: Conv2d(2C, 2C, 1) -> ReLU -> Conv2d(2C, 2C, 1)   (bias=False)
    wf1 = 0.1 * jax.random.normal(k1, (2 * C, 2 * C), dtype=jnp.float32)
    wf2 = 0.1 * jax.random.normal(k2, (2 * C, 2 * C), dtype=jnp.float32)
    # main: Conv2d(C, C, 3, pad=1) -> ReLU -> Conv2d(C, C, 3, pad=1) (bias=False)
    ws1 = 0.1 * jax.random.normal(k3, (C, C, 3, 3), dtype=jnp.float32)
    ws2 = 0.1 * jax.random.normal(k4, (C, C, 3, 3), dtype=jnp.float32)

    out = jax.block_until_ready(resfblock_forward(x, wf1, wf2, ws1, ws2))
    ref = _reference(x, wf1, wf2, ws1, ws2)
    assert out.shape == (B, C, H, W)
    err = float(jnp.max(jnp.abs(out - ref)))
    # Kernels use the default (bf16-input, f32-accumulate) MXU path; the
    # reference runs at HIGHEST precision, so allow a few 1e-2 of headroom.
    assert err < 5e-2, f"max abs error {err} vs reference"
    print("KERNEL_OK")
</pallas_src>

<mosaic_0001>
module attributes {stable_mosaic.version = 11 : i64} {
  func.func @_freq_mlp_kernel(%arg0: i32, %arg1: i32, %arg2: memref<1x16x256xf32, #tpu.memory_space<vmem>>, %arg3: memref<16x16xf32, #tpu.memory_space<vmem>>, %arg4: memref<16x16xf32, #tpu.memory_space<vmem>>, %arg5: memref<1x16x256xf32, #tpu.memory_space<vmem>>) attributes {dimension_semantics = [#tpu.dimension_semantics<parallel>, #tpu.dimension_semantics<parallel>], iteration_bounds = array<i64: 2, 1>, scalar_prefetch = 0 : i64, scratch_operands = 0 : i64, tpu.core_type = #tpu.core_type<tc>, window_params = [{transform_indices = @transform_0, window_bounds = array<i64: 1, 16, 256>}, {pipeline_mode = #tpu.pipeline_mode<synchronous>, transform_indices = @transform_1, window_bounds = array<i64: 16, 16>}, {pipeline_mode = #tpu.pipeline_mode<synchronous>, transform_indices = @transform_2, window_bounds = array<i64: 16, 16>}, {transform_indices = @transform_3, window_bounds = array<i64: 1, 16, 256>}]} {
    %c0 = arith.constant 0 : index
    %c0_0 = arith.constant 0 : index
    %0 = vector.load %arg3[%c0, %c0_0] : memref<16x16xf32, #tpu.memory_space<vmem>>, vector<16x16xf32>
    %c0_1 = arith.constant 0 : index
    %c0_2 = arith.constant 0 : index
    %c0_3 = arith.constant 0 : index
    %1 = vector.load %arg2[%c0_1, %c0_2, %c0_3] : memref<1x16x256xf32, #tpu.memory_space<vmem>>, vector<1x16x256xf32>
    %2 = vector.shape_cast %1 : vector<1x16x256xf32> to vector<16x256xf32>
    %cst = arith.constant dense<0.000000e+00> : vector<16x256xf32>
    %3 = tpu.matmul %0, %2, %cst {dimension_numbers = #tpu.dot_dimension_numbers<[1], [0], [0], [1], [0, 0, 1, 1], [], []>} : vector<16x16xf32>, vector<16x256xf32>, vector<16x256xf32> -> vector<16x256xf32>
    %cst_4 = arith.constant 0.000000e+00 : f32
    %4 = vector.broadcast %cst_4 : f32 to vector<16x256xf32>
    %5 = arith.maximumf %3, %4 : vector<16x256xf32>
    %c0_5 = arith.constant 0 : index
    %c0_6 = arith.constant 0 : index
    %6 = vector.load %arg4[%c0_5, %c0_6] : memref<16x16xf32, #tpu.memory_space<vmem>>, vector<16x16xf32>
    %cst_7 = arith.constant dense<0.000000e+00> : vector<16x256xf32>
    %7 = tpu.matmul %6, %5, %cst_7 {dimension_numbers = #tpu.dot_dimension_numbers<[1], [0], [0], [1], [0, 0, 1, 1], [], []>} : vector<16x16xf32>, vector<16x256xf32>, vector<16x256xf32> -> vector<16x256xf32>
    %c0_8 = arith.constant 0 : index
    %c0_9 = arith.constant 0 : index
    %c0_10 = arith.constant 0 : index
    %8 = vector.load %arg5[%c0_8, %c0_9, %c0_10] : memref<1x16x256xf32, #tpu.memory_space<vmem>>, vector<1x16x256xf32>
    %9 = vector.shape_cast %8 : vector<1x16x256xf32> to vector<16x256xf32>
    %10 = vector.shape_cast %7 : vector<16x256xf32> to vector<1x16x256xf32>
    tpu.vector_store %arg5[%c0_8, %c0_9, %c0_10], %10 {strides = array<i32>} : memref<1x16x256xf32, #tpu.memory_space<vmem>>, vector<1x16x256xf32>,
    return
  }
  func.func @transform_0(%arg0: i32, %arg1: i32) -> (i32, i32, i32) {
    %c0_i32 = arith.constant 0 : i32
    %c0_i32_0 = arith.constant 0 : i32
    return %arg0, %c0_i32, %arg1 : i32, i32, i32
  }
  func.func @transform_1(%arg0: i32, %arg1: i32) -> (i32, i32) {
    %c0_i32 = arith.constant 0 : i32
    %c0_i32_0 = arith.constant 0 : i32
    %c0_i32_1 = arith.constant 0 : i32
    return %c0_i32, %c0_i32_0 : i32, i32
  }
  func.func @transform_2(%arg0: i32, %arg1: i32) -> (i32, i32) {
    %c0_i32 = arith.constant 0 : i32
    %c0_i32_0 = arith.constant 0 : i32
    %c0_i32_1 = arith.constant 0 : i32
    return %c0_i32, %c0_i32_0 : i32, i32
  }
  func.func @transform_3(%arg0: i32, %arg1: i32) -> (i32, i32, i32) {
    %c0_i32 = arith.constant 0 : i32
    %c0_i32_0 = arith.constant 0 : i32
    return %arg0, %c0_i32, %arg1 : i32, i32, i32
  }
}

</mosaic_0001>

<llo_original>
// kernel: tpu_custom_call.1
$region0: #{tpu_custom_call.1}
  #allocation0 [shape = 'u32[]', space=smem, size = 0x4, offset = 0x4, fixed_abs, tag = 'smem constant byte address 0x4 - core index']
  #allocation1 [shape = 'u32[144,128]{1,0:T(1,128)}', space=vmem, size = 0x12000, scoped, tag = 'internal scratch']
  %s0 = inlined_call_operand.hbm [shape: f32[2,16,256], index: 0, kind: input, shape index: {}]
  %s1 = inlined_call_operand.hbm [shape: f32[16,16], index: 1, kind: input, shape index: {}]
  %s2 = inlined_call_operand.hbm [shape: f32[16,16], index: 2, kind: input, shape index: {}]
  %s3 = inlined_call_operand.hbm [shape: f32[2,16,256], index: 3, kind: output, shape index: {}]
  %s4 = sld [smem:[#allocation0]]
  $region57: #{tpu_custom_call.1} parent=0
    _
  %s6 = ssub.s32 1, %s4
  %s7 = scalar_select 0, %s6, %s4
  $region1: #{tpu_custom_call.1} parent=0
    #allocation2 [shape = 'u8[32768]{0}', space=vmem, size = 0x8000, scoped, tag = 'input window, operand 0']
    #allocation3 [shape = 's32[2]{0}', space=sflag, size = 0x8, scoped, tag = 'scoped memory for tpu_custom_call.1']
    #allocation4 [shape = 's32[2]{0}', space=sflag, size = 0x8, scoped, tag = 'scoped memory for tpu_custom_call.1']
    #allocation5 [shape = 'u8[8192]{0}', space=vmem, size = 0x2000, scoped, tag = 'input window, operand 1, single buffered']
    #allocation6 [shape = 's32[1]{0}', space=sflag, size = 0x4, scoped, tag = 'scoped memory for tpu_custom_call.1']
    #allocation7 [shape = 'u8[8192]{0}', space=vmem, size = 0x2000, scoped, tag = 'input window, operand 2, single buffered']
    #allocation8 [shape = 'u8[32768]{0}', space=vmem, size = 0x8000, scoped, tag = 'output window, operand 0']
    %8 = vsyncpa [#allocation3], 0
    %s9 = scalar_lea.sflag [#allocation3], 1
    %10 = vsyncpa %s9, 0
    %11 = vsyncpa [#allocation6], 0
    %12 = vsyncpa [#allocation4], 0
    %s13 = scalar_lea.sflag [#allocation4], 1
    %14 = vsyncpa %s13, 0
    loop: start=0, step=1, limit=4
    $region2: #{tpu_custom_call.1} parent=1 // loop_pre_header
      _
    $region3: #{tpu_custom_call.1} parent=1 // loop_header
      %s16 = sphi 0, %s20
      %p17 = scmp.ge.s32.totalorder %s16, 4
      %s23 = sphi 0, %s35
      %s24 = sphi 0, %s31
      %s25 = sphi 0, %s23
      %s26 = sphi 0, %s24
      %s27 = sphi 0, %s25
      %s28 = sphi 0, %s26
      %s40 = sphi 0, %s42
      %s43 = sphi 0, %s40
      %s44 = sphi 0, %s43
      %s60 = sphi 0, %s44
      %s64 = sphi 0, %s64
      %s66 = sphi 0, %s64
      %s67 = sphi 0, %s66
      %s81 = sphi 0, %s67
      %s85 = sphi 0, %s85
      %s87 = sphi 0, %s85
      %s88 = sphi 0, %s87
      %s102 = sphi 0, %s88
      %s110 = sphi 0, %s112
      %s113 = sphi 0, %s110
      %s114 = sphi 0, %s113
      %s130 = sphi 0, %s114
    $region4: #{tpu_custom_call.1} parent=1 // loop_header_branch
      %19 = sbr.rel (%p17) target = $region8
    $region5: #{tpu_custom_call.1} parent=1 // loop_body
      %s21 = ssub.s32 %s16, 1
      %s22 = ssub.s32 %s16, 2
      %s29 = sadd.s32 1, %s24
      %p30 = scmp.ge.s32.totalorder %s29, 1
      %s31 = scalar_select %p30, 0, %s29
      %s32 = sadd.s32 1, %s23
      %s33 = scalar_select %p30, %s32, %s23
      %p34 = scmp.ge.s32.totalorder %s33, 2
      %s35 = scalar_select %p34, 0, %s33
      %s36 = ssub.s32 %s23, %s35
      %s37 = ssub.s32 %s24, %s31
      %s38 = sor.u32 %s36, %s37
      %p39 = scmp.eq.s32.totalorder %s38, 0
      %s41 = sadd.s32 %s40, 1
      %s42 = scalar_select %p39, %s40, %s41
      %p45 = pneg %p39
      %p46 = scmp.eq.s32.totalorder %s16, 1
      %p47 = por %p45, %p46
      %p48 = scmp.ne.s32.totalorder %s40, %s43
      %p49 = scmp.eq.s32.totalorder %s16, 0
      %p50 = por %p48, %p49
      %p51 = scmp.ne.s32.totalorder %s40, %s43
      %p52 = scmp.eq.s32.totalorder %s21, 1
      %p53 = por %p51, %p52
      %p54 = scmp.ne.s32.totalorder %s43, %s44
      %p55 = scmp.eq.s32.totalorder %s21, 0
      %p56 = por %p54, %p55
      %p57 = scmp.ne.s32.totalorder %s43, %s44
      %p58 = scmp.eq.s32.totalorder %s22, 1
      %p59 = por %p57, %p58
      %p61 = scmp.ne.s32.totalorder %s44, %s60
      %p62 = scmp.eq.s32.totalorder %s22, 0
      %p63 = por %p61, %p62
      %s65 = sadd.s32 %s64, 1
      %p68 = scmp.eq.s32.totalorder %s16, 1
      %p69 = scmp.ne.s32.totalorder %s64, %s66
      %p70 = scmp.eq.s32.totalorder %s16, 0
      %p71 = por %p69, %p70
      %p72 = scmp.ne.s32.totalorder %s64, %s66
      %p73 = scmp.eq.s32.totalorder %s21, 1
      %p74 = por %p72, %p73
      %p75 = scmp.ne.s32.totalorder %s66, %s67
      %p76 = scmp.eq.s32.totalorder %s21, 0
      %p77 = por %p75, %p76
      %p78 = scmp.ne.s32.totalorder %s66, %s67
      %p79 = scmp.eq.s32.totalorder %s22, 1
      %p80 = por %p78, %p79
      %p82 = scmp.ne.s32.totalorder %s67, %s81
      %p83 = scmp.eq.s32.totalorder %s22, 0
      %p84 = por %p82, %p83
      %s86 = sadd.s32 %s85, 1
      %p89 = scmp.eq.s32.totalorder %s16, 1
      %p90 = scmp.ne.s32.totalorder %s85, %s87
      %p91 = scmp.eq.s32.totalorder %s16, 0
      %p92 = por %p90, %p91
      %p93 = scmp.ne.s32.totalorder %s85, %s87
      %p94 = scmp.eq.s32.totalorder %s21, 1
      %p95 = por %p93, %p94
      %p96 = scmp.ne.s32.totalorder %s87, %s88
      %p97 = scmp.eq.s32.totalorder %s21, 0
      %p98 = por %p96, %p97
      %p99 = scmp.ne.s32.totalorder %s87, %s88
      %p100 = scmp.eq.s32.totalorder %s22, 1
      %p101 = por %p99, %p100
      %p103 = scmp.ne.s32.totalorder %s88, %s102
      %p104 = scmp.eq.s32.totalorder %s22, 0
      %p105 = por %p103, %p104
      %s106 = ssub.s32 %s23, %s35
      %s107 = ssub.s32 %s24, %s31
      %s108 = sor.u32 %s106, %s107
      %p109 = scmp.eq.s32.totalorder %s108, 0
      %s111 = sadd.s32 %s110, 1
      %s112 = scalar_select %p109, %s110, %s111
      %p115 = pneg %p109
      %p116 = scmp.eq.s32.totalorder %s16, 1
      %p117 = por %p115, %p116
      %p118 = scmp.ne.s32.totalorder %s110, %s113
      %p119 = scmp.eq.s32.totalorder %s16, 0
      %p120 = por %p118, %p119
      %p121 = scmp.ne.s32.totalorder %s110, %s113
      %p122 = scmp.eq.s32.totalorder %s21, 1
      %p123 = por %p121, %p122
      %p124 = scmp.ne.s32.totalorder %s113, %s114
      %p125 = scmp.eq.s32.totalorder %s21, 0
      %p126 = por %p124, %p125
      %p127 = scmp.ne.s32.totalorder %s113, %s114
      %p128 = scmp.eq.s32.totalorder %s22, 1
      %p129 = por %p127, %p128
      %p131 = scmp.ne.s32.totalorder %s114, %s130
      %p132 = scmp.eq.s32.totalorder %s22, 0
      %p133 = por %p131, %p132
      %p134 = scmp.le.s32.totalorder 1, %s16
      %p135 = scmp.lt.s32.totalorder %s16, 3
      %p136 = pnand %p134, %p135
      %p137 = pneg %p136
      // Predicated region
      $region9: #{tpu_custom_call.1} parent=5 // pred_check
        _
      $region10: #{tpu_custom_call.1} parent=5 // pred_check_branch
        %139 = sbr.rel (%p136) target = $region12
      $region11: #{tpu_custom_call.1} parent=5 // pred_region
        %s140 = ssub.s32 %s16, 1
        // Predicated region
        $region13: #{tpu_custom_call.1} parent=11 // pred_check
          %p141 = pneg %p77
        $region14: #{tpu_custom_call.1} parent=11 // pred_check_branch
          %143 = sbr.rel (%p141) target = $region16
        $region15: #{tpu_custom_call.1} parent=11 // pred_region
          %s145 = ssub.s32 256, 256
          %146 = vsyncadd [#allocation6], %s145
          %s147 = sshll.u32 [#allocation5], 4
          %s148 = int_to_ptr.vmem [resolvable:$true] %s147
          %153 = dma.hbm_to_vmem [thread:$0]  %s1, 256, %s148, [#allocation6], 128, 128, 8
        $region16: #{tpu_custom_call.1} parent=11 // pred_fallthru
          _
        // Predicated region
        $region17: #{tpu_custom_call.1} parent=11 // pred_check
          %p154 = pneg %p98
        $region18: #{tpu_custom_call.1} parent=11 // pred_check_branch
          %156 = sbr.rel (%p154) target = $region20
        $region19: #{tpu_custom_call.1} parent=11 // pred_region
          %s158 = ssub.s32 256, 256
          %159 = vsyncadd [#allocation6], %s158
          %s160 = sshll.u32 [#allocation7], 4
          %s161 = int_to_ptr.vmem [resolvable:$true] %s160
          %166 = dma.hbm_to_vmem [thread:$0]  %s2, 256, %s161, [#allocation6], 128, 128, 8
        $region20: #{tpu_custom_call.1} parent=11 // pred_fallthru
          _
      $region12: #{tpu_custom_call.1} parent=5 // pred_fallthru
        _
      %p167 = scmp.lt.s32.totalorder %s16, 2
      // Predicated region
      $region21: #{tpu_custom_call.1} parent=5 // pred_check
        %p168 = pneg %p167
      $region22: #{tpu_custom_call.1} parent=5 // pred_check_branch
        %170 = sbr.rel (%p168) target = $region24
      $region23: #{tpu_custom_call.1} parent=5 // pred_region
        // Predicated region
        $region25: #{tpu_custom_call.1} parent=23 // pred_check
          %p171 = pneg %p50
        $region26: #{tpu_custom_call.1} parent=23 // pred_check_branch
          %173 = sbr.rel (%p171) target = $region28
        $region27: #{tpu_custom_call.1} parent=23 // pred_region
          %s174 = sand.u32 %s40, 1
          %s175 = scalar_lea.sflag [#allocation3], %s174
          %s176 = sand.u32 %s40, 1
          %s177 = smul.addr %s176, 32
          %s178 = scalar_lea.vmem [#allocation2], %s177
          %s179 = smul.u32 2, %s24
          %s181 = ssub.s32 512, 512
          %182 = vsyncadd %s175, %s181
          %s183 = smul.addr %s23, 4
          %s184 = sadd.s32 %s179, %s183
          %s185 = smul.addr %s184, 128
          %s186 = scalar_lea.hbm %s0, %s185
          %s187 = sshll.u32 %s178, 4
          %s188 = int_to_ptr.vmem [resolvable:$true] %s187
          %193 = dma.hbm_to_vmem [thread:$0]  %s186, 512, %s188, %s175, 256, 256, 16
        $region28: #{tpu_custom_call.1} parent=23 // pred_fallthru
          _
      $region24: #{tpu_custom_call.1} parent=5 // pred_fallthru
        _
      %p194 = scmp.le.s32.totalorder 1, %s16
      %p195 = scmp.lt.s32.totalorder %s16, 3
      %p196 = pnand %p194, %p195
      %p197 = pneg %p196
      // Predicated region
      $region29: #{tpu_custom_call.1} parent=5 // pred_check
        _
      $region30: #{tpu_custom_call.1} parent=5 // pred_check_branch
        %199 = sbr.rel (%p196) target = $region32
      $region31: #{tpu_custom_call.1} parent=5 // pred_region
        %s200 = ssub.s32 %s16, 1
        %s201 = sand.u32 %s43, 1
        %s202 = scalar_lea.sflag [#allocation3], %s201
        %s203 = sand.u32 %s43, 1
        %s204 = smul.addr %s203, 32
        %s205 = scalar_lea.vmem [#allocation2], %s204
        // Predicated region
        $region33: #{tpu_custom_call.1} parent=31 // pred_check
          %p206 = pneg %p56
        $region34: #{tpu_custom_call.1} parent=31 // pred_check_branch
          %208 = sbr.rel (%p206) target = $region36
        $region35: #{tpu_custom_call.1} parent=31 // pred_region
          %209 = dma.done %s202, 512
        $region36: #{tpu_custom_call.1} parent=31 // pred_fallthru
          _
        // Predicated region
        $region37: #{tpu_custom_call.1} parent=31 // pred_check
          %p210 = pneg %p77
        $region38: #{tpu_custom_call.1} parent=31 // pred_check_branch
          %212 = sbr.rel (%p210) target = $region40
        $region39: #{tpu_custom_call.1} parent=31 // pred_region
          %213 = dma.done [#allocation6], 256
        $region40: #{tpu_custom_call.1} parent=31 // pred_fallthru
          _
        // Predicated region
        $region41: #{tpu_custom_call.1} parent=31 // pred_check
          %p214 = pneg %p98
        $region42: #{tpu_custom_call.1} parent=31 // pred_check_branch
          %216 = sbr.rel (%p214) target = $region44
        $region43: #{tpu_custom_call.1} parent=31 // pred_region
          %217 = dma.done [#allocation6], 256
        $region44: #{tpu_custom_call.1} parent=31 // pred_fallthru
          _
        %s218 = sand.u32 %s43, 1
        %s219 = scalar_lea.sflag [#allocation3], %s218
        %s220 = sand.u32 %s43, 1
        %s221 = smul.addr %s220, 32
        %s222 = scalar_lea.vmem [#allocation2], %s221
        %p223 = pneg %p56
        %p224 = pneg %p53
        %p225 = pneg %p77
        %p226 = pneg %p74
        %p227 = pneg %p98
        %p228 = pneg %p95
        %p229 = pneg %p126
        %p230 = pneg %p123
        %s231 = sand.u32 %s113, 1
        %s232 = scalar_lea.sflag [#allocation4], %s231
        %s233 = sand.u32 %s113, 1
        %s234 = smul.addr %s233, 32
        %s235 = scalar_lea.vmem [#allocation8], %s234
        %s236 = smul.u32 2, %s26
        %s237 = smul.u32 2, %s26
        %v238 = vld [vmem:[#allocation5] sm:$0xff]
        %v239 = vld [vmem:[#allocation5 + $0x8] sm:$0xff]
        %v240 = vld [vmem:[%s205] sm:$0xff]
        %v241 = vld [vmem:[%s205 + $0x8] sm:$0xff]
        %v242 = vld [vmem:[%s205 + $0x10] sm:$0xff]
        %v243 = vld [vmem:[%s205 + $0x18] sm:$0xff]
        %vm244 = vcmask 130048
        %v246 = vsel %vm244, %v238, 0
        %v249 = vsel %vm244, %v239, 0
        %251 = vmatprep.subr.mxu0 0.0
        %252 = vmatpush1.msra.mxu0 0.0
        %253 = vmatprep.subr.mxu0 0.0
        %254 = vmatpush1.msra.mxu0 0.0
        %255 = vmatprep.subr.mxu0 0.0
        %256 = vmatpush1.msra.mxu0 0.0
        %257 = vmatprep.subr.mxu0 0.0
        %258 = vmatpush1.msra.mxu0 0.0
        %259 = vmatprep.subr.mxu0 0.0
        %260 = vmatpush1.msra.mxu0 0.0
        %261 = vmatprep.subr.mxu0 0.0
        %262 = vmatpush1.msra.mxu0 0.0
        %263 = vmatprep.subr.mxu0 0.0
        %264 = vmatpush1.msra.mxu0 0.0
        %265 = vmatprep.subr.mxu0 0.0
        %266 = vmatpush1.msra.mxu0 0.0
        %267 = vmatprep.subr.mxu0 0.0
        %268 = vmatpush1.msra.mxu0 0.0
        %269 = vmatprep.subr.mxu0 0.0
        %270 = vmatpush1.msra.mxu0 0.0
        %271 = vmatprep.subr.mxu0 0.0
        %272 = vmatpush1.msra.mxu0 0.0
        %273 = vmatprep.subr.mxu0 0.0
        %274 = vmatpush1.msra.mxu0 0.0
        %275 = vmatprep.subr.mxu0 0.0
        %276 = vmatpush1.msra.mxu0 0.0
        %277 = vmatprep.subr.mxu0 0.0
        %278 = vmatpush1.msra.mxu0 0.0
        %279 = vmatprep.subr.mxu0 %v243
        %280 = vmatpush1.msra.mxu0 %v242
        %281 = vmatprep.subr.mxu0 %v241
        %282 = vmatpush1.msra.mxu0 %v240
        %283 = vmatprep.subr.mxu0 0.0
        %284 = vmatpush2.msra.mxu0 0.0
        %285 = vmatprep.subr.mxu0 0.0
        %286 = vmatpush2.msra.mxu0 0.0
        %287 = vmatprep.subr.mxu0 0.0
        %288 = vmatpush2.msra.mxu0 0.0
        %289 = vmatprep.subr.mxu0 0.0
        %290 = vmatpush2.msra.mxu0 0.0
        %291 = vmatprep.subr.mxu0 0.0
        %292 = vmatpush2.msra.mxu0 0.0
        %293 = vmatprep.subr.mxu0 0.0
        %294 = vmatpush2.msra.mxu0 0.0
        %295 = vmatprep.subr.mxu0 0.0
        %296 = vmatpush2.msra.mxu0 0.0
        %297 = vmatprep.subr.mxu0 0.0
        %298 = vmatpush2.msra.mxu0 0.0
        %299 = vmatprep.subr.mxu0 0.0
        %300 = vmatpush2.msra.mxu0 0.0
        %301 = vmatprep.subr.mxu0 0.0
        %302 = vmatpush2.msra.mxu0 0.0
        %303 = vmatprep.subr.mxu0 0.0
        %304 = vmatpush2.msra.mxu0 0.0
        %305 = vmatprep.subr.mxu0 0.0
        %306 = vmatpush2.msra.mxu0 0.0
        %307 = vmatprep.subr.mxu0 0.0
        %308 = vmatpush2.msra.mxu0 0.0
        %309 = vmatprep.subr.mxu0 0.0
        %310 = vmatpush2.msra.mxu0 0.0
        %311 = vmatprep.subr.mxu0 0.0
        %312 = vmatpush2.msra.mxu0 0.0
        %313 = vmatprep.subr.mxu0 0.0
        %314 = vmatpush2.msra.mxu0 0.0
        %315 = vmatprep.mubr.f32.mxu0 0.0
        %316 = vmatmul.mubr.f32.gmra.mxu0 %v246
        %v317 = vpop.f32.mrf.mxu0
        %v318 = vadd.f32 0.0, %v317
        %v319 = vpop.f32.mrf.mxu0
        %v320 = vadd.f32 0.0, %v319
        %321 = vmatprep.mubr.f32.mxu0 0.0
        %322 = vmatmul.mubr.f32.gmra.mxu0 %v249
        %v323 = vpop.f32.mrf.mxu0
        %v324 = vadd.f32 0.0, %v323
        %v325 = vpop.f32.mrf.mxu0
        %v326 = vadd.f32 0.0, %v325
        %327 = vdwg.mxu0
        %v328 = vmax.f32 %v318, 0.0
        %v329 = vmax.f32 %v320, 0.0
        %v330 = vmax.f32 %v324, 0.0
        %v331 = vmax.f32 %v326, 0.0
        %v332 = vld [vmem:[#allocation7] sm:$0xff]
        %v333 = vld [vmem:[#allocation7 + $0x8] sm:$0xff]
        %v335 = vsel %vm244, %v332, 0
        %v338 = vsel %vm244, %v333, 0
        %340 = vmatprep.subr.mxu0 0.0
        %341 = vmatpush1.msra.mxu0 0.0
        %342 = vmatprep.subr.mxu0 0.0
        %343 = vmatpush1.msra.mxu0 0.0
        %344 = vmatprep.subr.mxu0 0.0
        %345 = vmatpush1.msra.mxu0 0.0
        %346 = vmatprep.subr.mxu0 0.0
        %347 = vmatpush1.msra.mxu0 0.0
        %348 = vmatprep.subr.mxu0 0.0
        %349 = vmatpush1.msra.mxu0 0.0
        %350 = vmatprep.subr.mxu0 0.0
        %351 = vmatpush1.msra.mxu0 0.0
        %352 = vmatprep.subr.mxu0 0.0
        %353 = vmatpush1.msra.mxu0 0.0
        %354 = vmatprep.subr.mxu0 0.0
        %355 = vmatpush1.msra.mxu0 0.0
        %356 = vmatprep.subr.mxu0 0.0
        %357 = vmatpush1.msra.mxu0 0.0
        %358 = vmatprep.subr.mxu0 0.0
        %359 = vmatpush1.msra.mxu0 0.0
        %360 = vmatprep.subr.mxu0 0.0
        %361 = vmatpush1.msra.mxu0 0.0
        %362 = vmatprep.subr.mxu0 0.0
        %363 = vmatpush1.msra.mxu0 0.0
        %364 = vmatprep.subr.mxu0 0.0
        %365 = vmatpush1.msra.mxu0 0.0
        %366 = vmatprep.subr.mxu0 0.0
        %367 = vmatpush1.msra.mxu0 0.0
        %368 = vmatprep.subr.mxu0 %v331
        %369 = vmatpush1.msra.mxu0 %v330
        %370 = vmatprep.subr.mxu0 %v329
        %371 = vmatpush1.msra.mxu0 %v328
        %372 = vmatprep.subr.mxu0 0.0
        %373 = vmatpush2.msra.mxu0 0.0
        %374 = vmatprep.subr.mxu0 0.0
        %375 = vmatpush2.msra.mxu0 0.0
        %376 = vmatprep.subr.mxu0 0.0
        %377 = vmatpush2.msra.mxu0 0.0
        %378 = vmatprep.subr.mxu0 0.0
        %379 = vmatpush2.msra.mxu0 0.0
        %380 = vmatprep.subr.mxu0 0.0
        %381 = vmatpush2.msra.mxu0 0.0
        %382 = vmatprep.subr.mxu0 0.0
        %383 = vmatpush2.msra.mxu0 0.0
        %384 = vmatprep.subr.mxu0 0.0
        %385 = vmatpush2.msra.mxu0 0.0
        %386 = vmatprep.subr.mxu0 0.0
        %387 = vmatpush2.msra.mxu0 0.0
        %388 = vmatprep.subr.mxu0 0.0
        %389 = vmatpush2.msra.mxu0 0.0
        %390 = vmatprep.subr.mxu0 0.0
        %391 = vmatpush2.msra.mxu0 0.0
        %392 = vmatprep.subr.mxu0 0.0
        %393 = vmatpush2.msra.mxu0 0.0
        %394 = vmatprep.subr.mxu0 0.0
        %395 = vmatpush2.msra.mxu0 0.0
        %396 = vmatprep.subr.mxu0 0.0
        %397 = vmatpush2.msra.mxu0 0.0
        %398 = vmatprep.subr.mxu0 0.0
        %399 = vmatpush2.msra.mxu0 0.0
        %400 = vmatprep.subr.mxu0 0.0
        %401 = vmatpush2.msra.mxu0 0.0
        %402 = vmatprep.subr.mxu0 0.0
        %403 = vmatpush2.msra.mxu0 0.0
        %404 = vmatprep.mubr.f32.mxu0 0.0
        %405 = vmatmul.mubr.f32.gmra.mxu0 %v335
        %v406 = vpop.f32.mrf.mxu0
        %v407 = vadd.f32 0.0, %v406
        %v408 = vpop.f32.mrf.mxu0
        %v409 = vadd.f32 0.0, %v408
        %410 = vmatprep.mubr.f32.mxu0 0.0
        %411 = vmatmul.mubr.f32.gmra.mxu0 %v338
        %v412 = vpop.f32.mrf.mxu0
        %v413 = vadd.f32 0.0, %v412
        %v414 = vpop.f32.mrf.mxu0
        %v415 = vadd.f32 0.0, %v414
        %416 = vdwg.mxu0
        %417 = vst [vmem:[%s235] sm:$0xff] %v407
        %418 = vst [vmem:[%s235 + $0x8] sm:$0xff] %v409
        %419 = vst [vmem:[%s235 + $0x10] sm:$0xff] %v413
        %420 = vst [vmem:[%s235 + $0x18] sm:$0xff] %v415
        %s421 = sand.u32 %s113, 1
        %s422 = scalar_lea.sflag [#allocation4], %s421
        %s423 = sand.u32 %s113, 1
        %s424 = smul.addr %s423, 32
        %s425 = scalar_lea.vmem [#allocation8], %s424
        // Predicated region
        $region45: #{tpu_custom_call.1} parent=31 // pred_check
          %p426 = pneg %p123
        $region46: #{tpu_custom_call.1} parent=31 // pred_check_branch
          %428 = sbr.rel (%p426) target = $region48
        $region47: #{tpu_custom_call.1} parent=31 // pred_region
          %s429 = smul.u32 2, %s26
          %s431 = ssub.s32 512, 512
          %432 = vsyncadd %s422, %s431
          %s433 = smul.addr %s25, 4
          %s434 = sadd.s32 %s429, %s433
          %s435 = smul.addr %s434, 128
          %s436 = scalar_lea.hbm %s3, %s435
          %s437 = sshll.u32 %s425, 4
          %s438 = int_to_ptr.vmem [resolvable:$true] %s437
          %443 = dma.vmem_to_hbm [thread:$0]  %s438, 512, %s436, %s422, 256, 256, 16
        $region48: #{tpu_custom_call.1} parent=31 // pred_fallthru
          _
      $region32: #{tpu_custom_call.1} parent=5 // pred_fallthru
        _
      %p444 = scmp.le.s32.totalorder 2, %s16
      // Predicated region
      $region49: #{tpu_custom_call.1} parent=5 // pred_check
        %p445 = pneg %p444
      $region50: #{tpu_custom_call.1} parent=5 // pred_check_branch
        %447 = sbr.rel (%p445) target = $region52
      $region51: #{tpu_custom_call.1} parent=5 // pred_region
        %s448 = ssub.s32 %s16, 2
        // Predicated region
        $region53: #{tpu_custom_call.1} parent=51 // pred_check
          %p449 = pneg %p129
        $region54: #{tpu_custom_call.1} parent=51 // pred_check_branch
          %451 = sbr.rel (%p449) target = $region56
        $region55: #{tpu_custom_call.1} parent=51 // pred_region
          %s452 = sand.u32 %s114, 1
          %s453 = scalar_lea.sflag [#allocation4], %s452
          %s454 = sand.u32 %s114, 1
          %s455 = smul.addr %s454, 32
          %s456 = scalar_lea.vmem [#allocation8], %s455
          %457 = dma.done %s453, 512
        $region56: #{tpu_custom_call.1} parent=51 // pred_fallthru
          _
      $region52: #{tpu_custom_call.1} parent=5 // pred_fallthru
        _
    $region6: #{tpu_custom_call.1} parent=1 // loop_footer
      %s20 = sadd.s32 1, %s16
    $region7: #{tpu_custom_call.1} parent=1 // loop_footer_branch
      %15 = sbr.rel target = $region3
    $region8: #{tpu_custom_call.1} parent=1 // loop_exit
      _
    %458 = vsyncpa [#allocation3], 1
    %s459 = scalar_lea.sflag [#allocation3], 1
    %460 = vsyncpa %s459, 1
    %461 = vsyncpa [#allocation6], 1
    %462 = vsyncpa [#allocation4], 1
    %s463 = scalar_lea.sflag [#allocation4], 1
    %464 = vsyncpa %s463, 1

</llo_original>
